<compile_context>
chip_gen: v5e
topology: v5e:2x2
jax: 0.10.0
libtpu: 0.0.40
codegen_flags: <defaults>
</compile_context>

<pallas_src>
import functools

import jax
import jax.numpy as jnp
from jax import lax
from jax.experimental import pallas as pl
from jax.experimental.pallas import tpu as pltpu

BN_EPS = 1e-5


# ----------------------------- Pallas kernel -----------------------------
def _double_conv_kernel(x_ref, w1_ref, s1_ref, w2_ref, s2_ref, o_ref, *,
                        H, compute_dtype):
    # x_ref : (Nb, H, W*Cin)        input images, NHWC flattened over (W, C)
    # w1_ref: (3, W*Cin,  W*Cmid)   banded conv1 weights (BN1 scale folded in)
    # s1_ref: (1, W*Cmid)           folded conv1 bias + BN1 shift, tiled over W (f32)
    # w2_ref: (3, W*Cmid, W*Cout)   banded conv2 weights (BN2 scale folded in)
    # s2_ref: (1, W*Cout)           folded conv2 bias + BN2 shift, tiled over W (f32)
    # o_ref : (Nb, H, W*Cout)
    Nb = x_ref.shape[0]
    WCin = x_ref.shape[2]
    M = Nb * H

    # Fold the batch into the matmul M dimension (leading-dim collapse is layout-free
    # when H is a multiple of 8).
    x = x_ref[...].reshape(M, WCin).astype(compute_dtype)

    # Masks that zero the ky=0 / ky=2 contributions at image boundary rows.  Because
    # batch is folded into M, these also kill cross-image bleed from the row shifts.
    row = lax.broadcasted_iota(jnp.int32, (M, 1), 0)
    not_first = (row % H) != 0          # no row above the first row of each image
    not_last = (row % H) != (H - 1)     # no row below the last row of each image

    def conv3x3(xm, w_ref, s_ref):
        # xm: (M, W*C_in) -> relu(conv3x3 + shift): (M, W*C_out), f32
        p0 = jnp.dot(xm, w_ref[0], preferred_element_type=jnp.float32)
        p1 = jnp.dot(xm, w_ref[1], preferred_element_type=jnp.float32)
        p2 = jnp.dot(xm, w_ref[2], preferred_element_type=jnp.float32)
        # ky=0 needs the row above (roll down by 1), ky=2 the row below (roll up by 1).
        c0 = jnp.where(not_first, pltpu.roll(p0, shift=1, axis=0), 0.0)
        c2 = jnp.where(not_last, pltpu.roll(p2, shift=M - 1, axis=0), 0.0)
        return jnp.maximum(p1 + c0 + c2 + s_ref[...], 0.0)   # f32 epilogue

    y1 = conv3x3(x, w1_ref, s1_ref)                       # (M, W*Cmid) f32
    y2 = conv3x3(y1.astype(compute_dtype), w2_ref, s2_ref)  # (M, W*Cout) f32
    o_ref[...] = y2.reshape(o_ref.shape).astype(o_ref.dtype)


# ----------------------------- host-side glue -----------------------------
def _fold_bn(w_hwio, bias, gamma, beta, mean, var):
    """Fold eval-mode BN into conv weights and a single shift."""
    scale = gamma / jnp.sqrt(var + BN_EPS)          # (Cout,)
    w_f = w_hwio * scale                            # (3,3,Cin,Cout)
    shift = (bias - mean) * scale + beta            # (Cout,)
    return w_f, shift


def _band_weights(w_f, W):
    """(3,3,Cin,Cout) -> (3, W*Cin, W*Cout) block-banded matrices (one per ky).

    band[ky, wp*Cin + c, w*Cout + co] = w_f[ky, wp - w + 1, c, co] for |wp - w| <= 1,
    i.e. the kx taps (and SAME padding in W) become part of a single matmul.
    """
    _, _, Cin, Cout = w_f.shape
    diff = jnp.arange(W)[:, None] - jnp.arange(W)[None, :]            # wp - w
    sel = (diff[None, :, :] == (jnp.arange(3) - 1)[:, None, None])    # (kx, wp, w)
    sel = sel.astype(w_f.dtype)
    band = jnp.einsum('xpw,yxio->ypiwo', sel, w_f)                    # (ky,wp,c,w,co)
    return band.reshape(3, W * Cin, W * Cout)


def _pick_batch_tile(N, H, target_rows=256):
    """Largest divisor of N such that Nb*H <= target_rows (MXU M depth)."""
    best = 1
    for nb in range(1, N + 1):
        if N % nb == 0 and nb * H <= target_rows:
            best = nb
    return best


def double_conv(x_nhwc, params, *, compute_dtype=jnp.float32):
    """Pallas implementation of DoubleConv.forward (== InConv.forward)."""
    N, H, W, Cin = x_nhwc.shape
    Cmid = params["w1"].shape[-1]
    Cout = params["w2"].shape[-1]

    w1f, sh1 = _fold_bn(params["w1"], params["b1"], params["g1"],
                        params["be1"], params["m1"], params["v1"])
    w2f, sh2 = _fold_bn(params["w2"], params["b2"], params["g2"],
                        params["be2"], params["m2"], params["v2"])
    w1b = _band_weights(w1f, W).astype(compute_dtype)     # (3, W*Cin,  W*Cmid)
    w2b = _band_weights(w2f, W).astype(compute_dtype)     # (3, W*Cmid, W*Cout)
    s1 = jnp.tile(sh1, W).reshape(1, W * Cmid).astype(jnp.float32)
    s2 = jnp.tile(sh2, W).reshape(1, W * Cout).astype(jnp.float32)

    x2d = x_nhwc.reshape(N, H, W * Cin)                   # free: NHWC is contiguous

    Nb = _pick_batch_tile(N, H)
    grid_n = N // Nb

    # VMEM budget: double-buffered in/out blocks + single-copy weights + intermediates.
    itemsize = x2d.dtype.itemsize
    w_itemsize = jnp.dtype(compute_dtype).itemsize
    vmem_est = (2 * Nb * H * W * Cin * itemsize +
                2 * Nb * H * W * Cout * itemsize +
                (w1b.size + w2b.size) * w_itemsize +
                (s1.size + s2.size) * 4 +
                2 * Nb * H * W * (Cmid + Cout) * 4)       # intermediate headroom
    vmem_limit = min(64 * 1024 * 1024,
                     max(16 * 1024 * 1024, int(1.5 * vmem_est)))

    kernel = functools.partial(_double_conv_kernel, H=H,
                               compute_dtype=compute_dtype)

    out2d = pl.pallas_call(
        kernel,
        out_shape=jax.ShapeDtypeStruct((N, H, W * Cout), x_nhwc.dtype),
        grid_spec=pltpu.PrefetchScalarGridSpec(
            num_scalar_prefetch=0,
            grid=(grid_n,),
            in_specs=[
                pl.BlockSpec((Nb, H, W * Cin), lambda n: (n, 0, 0)),
                # Grid-invariant weights/shifts: single resident VMEM copy, no
                # per-step DMA and no double-buffering.
                pl.BlockSpec(memory_space=pltpu.MemorySpace.VMEM),
                pl.BlockSpec(memory_space=pltpu.MemorySpace.VMEM),
                pl.BlockSpec(memory_space=pltpu.MemorySpace.VMEM),
                pl.BlockSpec(memory_space=pltpu.MemorySpace.VMEM),
            ],
            out_specs=pl.BlockSpec((Nb, H, W * Cout), lambda n: (n, 0, 0)),
        ),
        compiler_params=pltpu.CompilerParams(
            dimension_semantics=("parallel",),
            vmem_limit_bytes=vmem_limit),
    )(x2d, w1b, s1, w2b, s2)

    return out2d.reshape(N, H, W, Cout)


# InConv.forward is exactly DoubleConv.forward.
in_conv = double_conv


# ---------------- reference (pure JAX) for validation ----------------
def _ref_block(x, w, b, g, be, m, v):
    y = jax.lax.conv_general_dilated(
        x, w, window_strides=(1, 1), padding="SAME",
        dimension_numbers=("NHWC", "HWIO", "NHWC"))
    y = y + b[None, None, None, :]
    scale = g / jnp.sqrt(v + BN_EPS)
    shift = be - m * scale
    y = y * scale[None, None, None, :] + shift[None, None, None, :]
    return jnp.maximum(y, 0.0)


def double_conv_ref(x_nhwc, p):
    y = _ref_block(x_nhwc, p["w1"], p["b1"], p["g1"], p["be1"], p["m1"], p["v1"])
    return _ref_block(y, p["w2"], p["b2"], p["g2"], p["be2"], p["m2"], p["v2"])


def init_params(key, in_ch, out_ch):
    ks = jax.random.split(key, 12)
    fan1 = in_ch * 9
    fan2 = out_ch * 9
    return {
        # conv1
        "w1": jax.random.normal(ks[0], (3, 3, in_ch, out_ch), jnp.float32)
              * (2.0 / fan1) ** 0.5,
        "b1": jax.random.normal(ks[1], (out_ch,), jnp.float32) * 0.05,
        # bn1 (eval-mode running stats)
        "g1": 1.0 + 0.1 * jax.random.normal(ks[2], (out_ch,), jnp.float32),
        "be1": 0.1 * jax.random.normal(ks[3], (out_ch,), jnp.float32),
        "m1": 0.1 * jax.random.normal(ks[4], (out_ch,), jnp.float32),
        "v1": jax.random.uniform(ks[5], (out_ch,), jnp.float32, 0.5, 1.5),
        # conv2
        "w2": jax.random.normal(ks[6], (3, 3, out_ch, out_ch), jnp.float32)
              * (2.0 / fan2) ** 0.5,
        "b2": jax.random.normal(ks[7], (out_ch,), jnp.float32) * 0.05,
        # bn2
        "g2": 1.0 + 0.1 * jax.random.normal(ks[8], (out_ch,), jnp.float32),
        "be2": 0.1 * jax.random.normal(ks[9], (out_ch,), jnp.float32),
        "m2": 0.1 * jax.random.normal(ks[10], (out_ch,), jnp.float32),
        "v2": jax.random.uniform(ks[11], (out_ch,), jnp.float32, 0.5, 1.5),
    }


if __name__ == "__main__":
    key = jax.random.PRNGKey(0)
    k_x, k_p = jax.random.split(key)

    N, in_ch, out_ch, H, W = 2, 4, 8, 16, 16
    x_nchw = jax.random.normal(k_x, (N, in_ch, H, W), jnp.float32)  # PyTorch layout
    x_nhwc = jnp.transpose(x_nchw, (0, 2, 3, 1))                    # kernel layout

    params = init_params(k_p, in_ch, out_ch)
    ref = double_conv_ref(x_nhwc, params)

    # Default f32 path: tight tolerance vs the reference.
    out = in_conv(x_nhwc, params)
    out = jax.block_until_ready(out)
    assert out.shape == (N, H, W, out_ch)
    assert jnp.allclose(out, ref, atol=2e-4, rtol=2e-4), "f32 mismatch vs reference"

    # bf16 opt-in (native MXU path on v6e/v7x): matmul operands in bf16, f32 accumulate
    # and f32 epilogue; looser tolerance as expected.
    out_bf16 = in_conv(x_nhwc, params, compute_dtype=jnp.bfloat16)
    out_bf16 = jax.block_until_ready(out_bf16)
    assert jnp.allclose(out_bf16, ref, atol=1e-1, rtol=1e-1), "bf16 mismatch vs reference"

    print("KERNEL_OK")
</pallas_src>

<mosaic_0001>
module attributes {stable_mosaic.version = 11 : i64} {
  func.func @_double_conv_kernel(%arg0: i32, %arg1: memref<2x16x64xf32, #tpu.memory_space<vmem>>, %arg2: memref<3x64x128xf32, #tpu.memory_space<vmem>>, %arg3: memref<1x128xf32, #tpu.memory_space<vmem>>, %arg4: memref<3x128x128xf32, #tpu.memory_space<vmem>>, %arg5: memref<1x128xf32, #tpu.memory_space<vmem>>, %arg6: memref<2x16x128xf32, #tpu.memory_space<vmem>>) attributes {dimension_semantics = [#tpu.dimension_semantics<parallel>], iteration_bounds = array<i64: 1>, scalar_prefetch = 0 : i64, scratch_operands = 0 : i64, tpu.core_type = #tpu.core_type<tc>, window_params = [{transform_indices = @transform_0, window_bounds = array<i64: 2, 16, 64>}, {pipeline_mode = #tpu.pipeline_mode<synchronous>, transform_indices = @transform_1, window_bounds = array<i64: 3, 64, 128>}, {pipeline_mode = #tpu.pipeline_mode<synchronous>, transform_indices = @transform_2, window_bounds = array<i64: 1, 128>}, {pipeline_mode = #tpu.pipeline_mode<synchronous>, transform_indices = @transform_3, window_bounds = array<i64: 3, 128, 128>}, {pipeline_mode = #tpu.pipeline_mode<synchronous>, transform_indices = @transform_4, window_bounds = array<i64: 1, 128>}, {transform_indices = @transform_5, window_bounds = array<i64: 2, 16, 128>}]} {
    %c0 = arith.constant 0 : index
    %c0_0 = arith.constant 0 : index
    %c0_1 = arith.constant 0 : index
    %0 = vector.load %arg1[%c0, %c0_0, %c0_1] : memref<2x16x64xf32, #tpu.memory_space<vmem>>, vector<2x16x64xf32>
    %1 = vector.shape_cast %0 : vector<2x16x64xf32> to vector<32x64xf32>
    %2 = tpu.iota {dimensions = array<i32: 0>} : vector<32x1xi32>
    %c16_i32 = arith.constant 16 : i32
    %c0_i32 = arith.constant 0 : i32
    %3 = arith.cmpi eq, %c16_i32, %c0_i32 : i32
    %c1_i32 = arith.constant 1 : i32
    %4 = arith.select %3, %c1_i32, %c16_i32 : i32
    %5 = vector.broadcast %4 : i32 to vector<32x1xi32>
    %6 = arith.remsi %2, %5 : vector<32x1xi32>
    %c0_i32_2 = arith.constant 0 : i32
    %7 = vector.broadcast %c0_i32_2 : i32 to vector<32x1xi32>
    %8 = arith.cmpi ne, %6, %7 : vector<32x1xi32>
    %c0_i32_3 = arith.constant 0 : i32
    %9 = vector.broadcast %c0_i32_3 : i32 to vector<32x1xi32>
    %10 = arith.cmpi slt, %6, %9 : vector<32x1xi32>
    %c0_i32_4 = arith.constant 0 : i32
    %11 = arith.cmpi slt, %4, %c0_i32_4 : i32
    %12 = vector.broadcast %11 : i1 to vector<32x1xi1>
    %13 = vector.broadcast %12 : vector<32x1xi1> to vector<32x1xi1>
    %14 = arith.xori %10, %13 : vector<32x1xi1>
    %15 = arith.andi %14, %8 : vector<32x1xi1>
    %16 = vector.broadcast %4 : i32 to vector<32x1xi32>
    %17 = arith.addi %6, %16 : vector<32x1xi32>
    %18 = arith.select %15, %17, %6 : vector<32x1xi1>, vector<32x1xi32>
    %c0_i32_5 = arith.constant 0 : i32
    %19 = vector.broadcast %c0_i32_5 : i32 to vector<32x1xi32>
    %20 = arith.cmpi ne, %18, %19 : vector<32x1xi32>
    %c16_i32_6 = arith.constant 16 : i32
    %c0_i32_7 = arith.constant 0 : i32
    %21 = arith.cmpi eq, %c16_i32_6, %c0_i32_7 : i32
    %c1_i32_8 = arith.constant 1 : i32
    %22 = arith.select %21, %c1_i32_8, %c16_i32_6 : i32
    %23 = vector.broadcast %22 : i32 to vector<32x1xi32>
    %24 = arith.remsi %2, %23 : vector<32x1xi32>
    %c0_i32_9 = arith.constant 0 : i32
    %25 = vector.broadcast %c0_i32_9 : i32 to vector<32x1xi32>
    %26 = arith.cmpi ne, %24, %25 : vector<32x1xi32>
    %c0_i32_10 = arith.constant 0 : i32
    %27 = vector.broadcast %c0_i32_10 : i32 to vector<32x1xi32>
    %28 = arith.cmpi slt, %24, %27 : vector<32x1xi32>
    %c0_i32_11 = arith.constant 0 : i32
    %29 = arith.cmpi slt, %22, %c0_i32_11 : i32
    %30 = vector.broadcast %29 : i1 to vector<32x1xi1>
    %31 = vector.broadcast %30 : vector<32x1xi1> to vector<32x1xi1>
    %32 = arith.xori %28, %31 : vector<32x1xi1>
    %33 = arith.andi %32, %26 : vector<32x1xi1>
    %34 = vector.broadcast %22 : i32 to vector<32x1xi32>
    %35 = arith.addi %24, %34 : vector<32x1xi32>
    %36 = arith.select %33, %35, %24 : vector<32x1xi1>, vector<32x1xi32>
    %c15_i32 = arith.constant 15 : i32
    %37 = vector.broadcast %c15_i32 : i32 to vector<32x1xi32>
    %38 = arith.cmpi ne, %36, %37 : vector<32x1xi32>
    %c0_12 = arith.constant 0 : index
    %c0_13 = arith.constant 0 : index
    %c0_14 = arith.constant 0 : index
    %39 = vector.load %arg2[%c0_12, %c0_13, %c0_14] : memref<3x64x128xf32, #tpu.memory_space<vmem>>, vector<1x64x128xf32>
    %40 = vector.shape_cast %39 : vector<1x64x128xf32> to vector<64x128xf32>
    %cst = arith.constant dense<0.000000e+00> : vector<32x128xf32>
    %41 = tpu.matmul %1, %40, %cst {dimension_numbers = #tpu.dot_dimension_numbers<[1], [0], [0], [1], [0, 0, 1, 1], [], []>} : vector<32x64xf32>, vector<64x128xf32>, vector<32x128xf32> -> vector<32x128xf32>
    %c1 = arith.constant 1 : index
    %c0_15 = arith.constant 0 : index
    %c0_16 = arith.constant 0 : index
    %42 = vector.load %arg2[%c1, %c0_15, %c0_16] : memref<3x64x128xf32, #tpu.memory_space<vmem>>, vector<1x64x128xf32>
    %43 = vector.shape_cast %42 : vector<1x64x128xf32> to vector<64x128xf32>
    %cst_17 = arith.constant dense<0.000000e+00> : vector<32x128xf32>
    %44 = tpu.matmul %1, %43, %cst_17 {dimension_numbers = #tpu.dot_dimension_numbers<[1], [0], [0], [1], [0, 0, 1, 1], [], []>} : vector<32x64xf32>, vector<64x128xf32>, vector<32x128xf32> -> vector<32x128xf32>
    %c2 = arith.constant 2 : index
    %c0_18 = arith.constant 0 : index
    %c0_19 = arith.constant 0 : index
    %45 = vector.load %arg2[%c2, %c0_18, %c0_19] : memref<3x64x128xf32, #tpu.memory_space<vmem>>, vector<1x64x128xf32>
    %46 = vector.shape_cast %45 : vector<1x64x128xf32> to vector<64x128xf32>
    %cst_20 = arith.constant dense<0.000000e+00> : vector<32x128xf32>
    %47 = tpu.matmul %1, %46, %cst_20 {dimension_numbers = #tpu.dot_dimension_numbers<[1], [0], [0], [1], [0, 0, 1, 1], [], []>} : vector<32x64xf32>, vector<64x128xf32>, vector<32x128xf32> -> vector<32x128xf32>
    %c1_i32_21 = arith.constant 1 : i32
    %48 = tpu.dynamic_rotate %41 by %c1_i32_21 dim 0 : vector<32x128xf32>, i32 -> vector<32x128xf32>
    %cst_22 = arith.constant 0.000000e+00 : f32
    %49 = vector.shape_cast %20 : vector<32x1xi1> to vector<32x1xi1>
    %50 = vector.broadcast %49 : vector<32x1xi1> to vector<32x128xi1>
    %51 = vector.broadcast %cst_22 : f32 to vector<32x128xf32>
    %52 = arith.select %50, %48, %51 : vector<32x128xi1>, vector<32x128xf32>
    %c31_i32 = arith.constant 31 : i32
    %53 = tpu.dynamic_rotate %47 by %c31_i32 dim 0 : vector<32x128xf32>, i32 -> vector<32x128xf32>
    %cst_23 = arith.constant 0.000000e+00 : f32
    %54 = vector.shape_cast %38 : vector<32x1xi1> to vector<32x1xi1>
    %55 = vector.broadcast %54 : vector<32x1xi1> to vector<32x128xi1>
    %56 = vector.broadcast %cst_23 : f32 to vector<32x128xf32>
    %57 = arith.select %55, %53, %56 : vector<32x128xi1>, vector<32x128xf32>
    %58 = arith.addf %44, %52 : vector<32x128xf32>
    %59 = arith.addf %58, %57 : vector<32x128xf32>
    %c0_24 = arith.constant 0 : index
    %c0_25 = arith.constant 0 : index
    %60 = vector.load %arg3[%c0_24, %c0_25] : memref<1x128xf32, #tpu.memory_space<vmem>>, vector<1x128xf32>
    %61 = vector.broadcast %60 : vector<1x128xf32> to vector<32x128xf32>
    %62 = arith.addf %59, %61 : vector<32x128xf32>
    %cst_26 = arith.constant 0.000000e+00 : f32
    %63 = vector.broadcast %cst_26 : f32 to vector<32x128xf32>
    %64 = arith.maximumf %62, %63 : vector<32x128xf32>
    %c0_27 = arith.constant 0 : index
    %c0_28 = arith.constant 0 : index
    %c0_29 = arith.constant 0 : index
    %65 = vector.load %arg4[%c0_27, %c0_28, %c0_29] : memref<3x128x128xf32, #tpu.memory_space<vmem>>, vector<1x128x128xf32>
    %66 = vector.shape_cast %65 : vector<1x128x128xf32> to vector<128x128xf32>
    %cst_30 = arith.constant dense<0.000000e+00> : vector<32x128xf32>
    %67 = tpu.matmul %64, %66, %cst_30 {dimension_numbers = #tpu.dot_dimension_numbers<[1], [0], [0], [1], [0, 0, 1, 1], [], []>} : vector<32x128xf32>, vector<128x128xf32>, vector<32x128xf32> -> vector<32x128xf32>
    %c1_31 = arith.constant 1 : index
    %c0_32 = arith.constant 0 : index
    %c0_33 = arith.constant 0 : index
    %68 = vector.load %arg4[%c1_31, %c0_32, %c0_33] : memref<3x128x128xf32, #tpu.memory_space<vmem>>, vector<1x128x128xf32>
    %69 = vector.shape_cast %68 : vector<1x128x128xf32> to vector<128x128xf32>
    %cst_34 = arith.constant dense<0.000000e+00> : vector<32x128xf32>
    %70 = tpu.matmul %64, %69, %cst_34 {dimension_numbers = #tpu.dot_dimension_numbers<[1], [0], [0], [1], [0, 0, 1, 1], [], []>} : vector<32x128xf32>, vector<128x128xf32>, vector<32x128xf32> -> vector<32x128xf32>
    %c2_35 = arith.constant 2 : index
    %c0_36 = arith.constant 0 : index
    %c0_37 = arith.constant 0 : index
    %71 = vector.load %arg4[%c2_35, %c0_36, %c0_37] : memref<3x128x128xf32, #tpu.memory_space<vmem>>, vector<1x128x128xf32>
    %72 = vector.shape_cast %71 : vector<1x128x128xf32> to vector<128x128xf32>
    %cst_38 = arith.constant dense<0.000000e+00> : vector<32x128xf32>
    %73 = tpu.matmul %64, %72, %cst_38 {dimension_numbers = #tpu.dot_dimension_numbers<[1], [0], [0], [1], [0, 0, 1, 1], [], []>} : vector<32x128xf32>, vector<128x128xf32>, vector<32x128xf32> -> vector<32x128xf32>
    %c1_i32_39 = arith.constant 1 : i32
    %74 = tpu.dynamic_rotate %67 by %c1_i32_39 dim 0 : vector<32x128xf32>, i32 -> vector<32x128xf32>
    %cst_40 = arith.constant 0.000000e+00 : f32
    %75 = vector.shape_cast %20 : vector<32x1xi1> to vector<32x1xi1>
    %76 = vector.broadcast %75 : vector<32x1xi1> to vector<32x128xi1>
    %77 = vector.broadcast %cst_40 : f32 to vector<32x128xf32>
    %78 = arith.select %76, %74, %77 : vector<32x128xi1>, vector<32x128xf32>
    %c31_i32_41 = arith.constant 31 : i32
    %79 = tpu.dynamic_rotate %73 by %c31_i32_41 dim 0 : vector<32x128xf32>, i32 -> vector<32x128xf32>
    %cst_42 = arith.constant 0.000000e+00 : f32
    %80 = vector.shape_cast %38 : vector<32x1xi1> to vector<32x1xi1>
    %81 = vector.broadcast %80 : vector<32x1xi1> to vector<32x128xi1>
    %82 = vector.broadcast %cst_42 : f32 to vector<32x128xf32>
    %83 = arith.select %81, %79, %82 : vector<32x128xi1>, vector<32x128xf32>
    %84 = arith.addf %70, %78 : vector<32x128xf32>
    %85 = arith.addf %84, %83 : vector<32x128xf32>
    %c0_43 = arith.constant 0 : index
    %c0_44 = arith.constant 0 : index
    %86 = vector.load %arg5[%c0_43, %c0_44] : memref<1x128xf32, #tpu.memory_space<vmem>>, vector<1x128xf32>
    %87 = vector.broadcast %86 : vector<1x128xf32> to vector<32x128xf32>
    %88 = arith.addf %85, %87 : vector<32x128xf32>
    %cst_45 = arith.constant 0.000000e+00 : f32
    %89 = vector.broadcast %cst_45 : f32 to vector<32x128xf32>
    %90 = arith.maximumf %88, %89 : vector<32x128xf32>
    %91 = vector.shape_cast %90 : vector<32x128xf32> to vector<2x16x128xf32>
    %c0_46 = arith.constant 0 : index
    %c0_47 = arith.constant 0 : index
    %c0_48 = arith.constant 0 : index
    %92 = vector.load %arg6[%c0_46, %c0_47, %c0_48] : memref<2x16x128xf32, #tpu.memory_space<vmem>>, vector<2x16x128xf32>
    tpu.vector_store %arg6[%c0_46, %c0_47, %c0_48], %91 {strides = array<i32>} : memref<2x16x128xf32, #tpu.memory_space<vmem>>, vector<2x16x128xf32>,
    return
  }
  func.func @transform_0(%arg0: i32) -> (i32, i32, i32) {
    %c0_i32 = arith.constant 0 : i32
    %c0_i32_0 = arith.constant 0 : i32
    %c0_i32_1 = arith.constant 0 : i32
    return %arg0, %c0_i32, %c0_i32_0 : i32, i32, i32
  }
  func.func @transform_1(%arg0: i32) -> (i32, i32, i32) {
    %c0_i32 = arith.constant 0 : i32
    %c0_i32_0 = arith.constant 0 : i32
    %c0_i32_1 = arith.constant 0 : i32
    %c0_i32_2 = arith.constant 0 : i32
    return %c0_i32, %c0_i32_0, %c0_i32_1 : i32, i32, i32
  }
  func.func @transform_2(%arg0: i32) -> (i32, i32) {
    %c0_i32 = arith.constant 0 : i32
    %c0_i32_0 = arith.constant 0 : i32
    %c0_i32_1 = arith.constant 0 : i32
    return %c0_i32, %c0_i32_0 : i32, i32
  }
  func.func @transform_3(%arg0: i32) -> (i32, i32, i32) {
    %c0_i32 = arith.constant 0 : i32
    %c0_i32_0 = arith.constant 0 : i32
    %c0_i32_1 = arith.constant 0 : i32
    %c0_i32_2 = arith.constant 0 : i32
    return %c0_i32, %c0_i32_0, %c0_i32_1 : i32, i32, i32
  }
  func.func @transform_4(%arg0: i32) -> (i32, i32) {
    %c0_i32 = arith.constant 0 : i32
    %c0_i32_0 = arith.constant 0 : i32
    %c0_i32_1 = arith.constant 0 : i32
    return %c0_i32, %c0_i32_0 : i32, i32
  }
  func.func @transform_5(%arg0: i32) -> (i32, i32, i32) {
    %c0_i32 = arith.constant 0 : i32
    %c0_i32_0 = arith.constant 0 : i32
    %c0_i32_1 = arith.constant 0 : i32
    return %arg0, %c0_i32, %c0_i32_0 : i32, i32, i32
  }
}

</mosaic_0001>

<llo_original>
// kernel: tpu_custom_call.1
$region0: #{tpu_custom_call.1}
  #allocation0 [shape = 'u32[]', space=smem, size = 0x4, offset = 0x4, fixed_abs, tag = 'smem constant byte address 0x4 - core index']
  #allocation1 [shape = 'u32[72,128]{1,0:T(1,128)}', space=vmem, size = 0x9000, scoped, tag = 'internal scratch']
  %s0 = inlined_call_operand.hbm [shape: f32[2,16,64], index: 0, kind: input, shape index: {}]
  %s1 = inlined_call_operand.hbm [shape: f32[3,64,128], index: 1, kind: input, shape index: {}]
  %s2 = inlined_call_operand.vmem [shape: f32[1,128], index: 2, kind: input, shape index: {}]
  %s3 = inlined_call_operand.hbm [shape: f32[3,128,128], index: 3, kind: input, shape index: {}]
  %s4 = inlined_call_operand.vmem [shape: f32[1,128], index: 4, kind: input, shape index: {}]
  %s5 = inlined_call_operand.hbm [shape: f32[2,16,128], index: 5, kind: output, shape index: {}]
  %s6 = sld [smem:[#allocation0]]
  $region42: #{tpu_custom_call.1} parent=0
    _
  %s8 = ssub.s32 1, %s6
  %s9 = scalar_select 0, %s8, %s6
  $region1: #{tpu_custom_call.1} parent=0
    #allocation2 [shape = 'u8[16384]{0}', space=vmem, size = 0x4000, scoped, tag = 'input window, operand 0, single buffered']
    #allocation3 [shape = 's32[1]{0}', space=sflag, size = 0x4, scoped, tag = 'scoped memory for tpu_custom_call.1']
    #allocation4 [shape = 's32[1]{0}', space=sflag, size = 0x4, scoped, tag = 'scoped memory for tpu_custom_call.1']
    #allocation5 [shape = 'u8[98304]{0}', space=vmem, size = 0x18000, scoped, tag = 'input window, operand 1, single buffered']
    #allocation6 [shape = 's32[1]{0}', space=sflag, size = 0x4, scoped, tag = 'scoped memory for tpu_custom_call.1']
    #allocation7 [shape = 'u8[196608]{0}', space=vmem, size = 0x30000, scoped, tag = 'input window, operand 3, single buffered']
    #allocation8 [shape = 'u8[16384]{0}', space=vmem, size = 0x4000, scoped, tag = 'output window, operand 0, single buffered']
    %10 = vsyncpa [#allocation3], 0
    %11 = vsyncpa [#allocation6], 0
    %12 = vsyncpa [#allocation4], 0
    // Predicated region
    $region2: #{tpu_custom_call.1} parent=1 // pred_check
      _
    $region3: #{tpu_custom_call.1} parent=1 // pred_check_branch
      %14 = sbr.rel (0) target = $region5
    $region4: #{tpu_custom_call.1} parent=1 // pred_region
      %16 = vsyncadd [#allocation3], 0
      %s17 = sshll.u32 %s0, 4
      %s18 = int_to_ptr.hbm [resolvable:$true] %s17
      %s19 = sshll.u32 [#allocation2], 4
      %s20 = int_to_ptr.vmem [resolvable:$true] %s19
      %25 = dma.hbm_to_vmem [thread:$0]  %s18, 512, %s20, [#allocation3], 128, 128, 8
    $region5: #{tpu_custom_call.1} parent=1 // pred_fallthru
      _
    // Predicated region
    $region6: #{tpu_custom_call.1} parent=1 // pred_check
      _
    $region7: #{tpu_custom_call.1} parent=1 // pred_check_branch
      %27 = sbr.rel (0) target = $region9
    $region8: #{tpu_custom_call.1} parent=1 // pred_region
      %29 = vsyncadd [#allocation6], 0
      %s30 = sshll.u32 %s1, 4
      %s31 = int_to_ptr.hbm [resolvable:$true] %s30
      %s32 = sshll.u32 [#allocation5], 4
      %s33 = int_to_ptr.vmem [resolvable:$true] %s32
      %38 = dma.hbm_to_vmem [thread:$0]  %s31, 3072, %s33, [#allocation6], 128, 128, 8
    $region9: #{tpu_custom_call.1} parent=1 // pred_fallthru
      _
    // Predicated region
    $region10: #{tpu_custom_call.1} parent=1 // pred_check
      _
    $region11: #{tpu_custom_call.1} parent=1 // pred_check_branch
      %40 = sbr.rel (0) target = $region13
    $region12: #{tpu_custom_call.1} parent=1 // pred_region
      _
    $region13: #{tpu_custom_call.1} parent=1 // pred_fallthru
      _
    // Predicated region
    $region14: #{tpu_custom_call.1} parent=1 // pred_check
      _
    $region15: #{tpu_custom_call.1} parent=1 // pred_check_branch
      %42 = sbr.rel (0) target = $region17
    $region16: #{tpu_custom_call.1} parent=1 // pred_region
      %44 = vsyncadd [#allocation6], 0
      %s45 = sshll.u32 %s3, 4
      %s46 = int_to_ptr.hbm [resolvable:$true] %s45
      %s47 = sshll.u32 [#allocation7], 4
      %s48 = int_to_ptr.vmem [resolvable:$true] %s47
      %53 = dma.hbm_to_vmem [thread:$0]  %s46, 6144, %s48, [#allocation6], 128, 128, 8
    $region17: #{tpu_custom_call.1} parent=1 // pred_fallthru
      _
    // Predicated region
    $region18: #{tpu_custom_call.1} parent=1 // pred_check
      _
    $region19: #{tpu_custom_call.1} parent=1 // pred_check_branch
      %55 = sbr.rel (0) target = $region21
    $region20: #{tpu_custom_call.1} parent=1 // pred_region
      _
    $region21: #{tpu_custom_call.1} parent=1 // pred_fallthru
      _
    // Predicated region
    $region22: #{tpu_custom_call.1} parent=1 // pred_check
      _
    $region23: #{tpu_custom_call.1} parent=1 // pred_check_branch
      %57 = sbr.rel (0) target = $region25
    $region24: #{tpu_custom_call.1} parent=1 // pred_region
      %59 = dma.done [#allocation3], 512
    $region25: #{tpu_custom_call.1} parent=1 // pred_fallthru
      _
    // Predicated region
    $region26: #{tpu_custom_call.1} parent=1 // pred_check
      _
    $region27: #{tpu_custom_call.1} parent=1 // pred_check_branch
      %61 = sbr.rel (0) target = $region29
    $region28: #{tpu_custom_call.1} parent=1 // pred_region
      %63 = dma.done [#allocation6], 3072
    $region29: #{tpu_custom_call.1} parent=1 // pred_fallthru
      _
    // Predicated region
    $region30: #{tpu_custom_call.1} parent=1 // pred_check
      _
    $region31: #{tpu_custom_call.1} parent=1 // pred_check_branch
      %65 = sbr.rel (0) target = $region33
    $region32: #{tpu_custom_call.1} parent=1 // pred_region
      %67 = dma.done [#allocation6], 6144
    $region33: #{tpu_custom_call.1} parent=1 // pred_fallthru
      _
    %v68 = vld [vmem:[#allocation2] sm:$0xff]
    %v69 = vld [vmem:[#allocation2 + $0x8] sm:$0xff]
    %v70 = vld [vmem:[#allocation2 + $0x10] sm:$0xff]
    %v71 = vld [vmem:[#allocation2 + $0x18] sm:$0xff]
    %v72 = vlaneseq
    %v73 = vshrl.u32 %v72, 7
    %v74 = vadd.s32 %v73, 8
    %v75 = vadd.s32 %v73, 16
    %v76 = vadd.s32 %v73, 24
    %vm77 = vcmp.lt.s32.totalorder %v73, 0
    %v78 = vsub.s32 0, %v73
    %v79 = vsel %vm77, %v78, %v73
    %v80 = vshrl.u32 %v79, 4
    %v81 = vand.u32 %v79, 15
    %v82 = vsub.s32 0, %v81
    %v83 = vsel %vm77, %v82, %v81
    %vm84 = vcmp.lt.s32.totalorder %v74, 0
    %v85 = vsub.s32 0, %v74
    %v86 = vsel %vm84, %v85, %v74
    %v87 = vshrl.u32 %v86, 4
    %v88 = vand.u32 %v86, 15
    %v89 = vsub.s32 0, %v88
    %v90 = vsel %vm84, %v89, %v88
    %vm91 = vcmp.lt.s32.totalorder %v75, 0
    %v92 = vsub.s32 0, %v75
    %v93 = vsel %vm91, %v92, %v75
    %v94 = vshrl.u32 %v93, 4
    %v95 = vand.u32 %v93, 15
    %v96 = vsub.s32 0, %v95
    %v97 = vsel %vm91, %v96, %v95
    %vm98 = vcmp.lt.s32.totalorder %v76, 0
    %v99 = vsub.s32 0, %v76
    %v100 = vsel %vm98, %v99, %v76
    %v101 = vshrl.u32 %v100, 4
    %v102 = vand.u32 %v100, 15
    %v103 = vsub.s32 0, %v102
    %v104 = vsel %vm98, %v103, %v102
    %vm105 = vcmp.ne.s32.totalorder %v83, 0
    %vm106 = vcmp.ne.s32.totalorder %v90, 0
    %vm107 = vcmp.ne.s32.totalorder %v97, 0
    %vm108 = vcmp.ne.s32.totalorder %v104, 0
    %vm109 = vcmp.lt.s32.totalorder %v83, 0
    %vm110 = vcmp.lt.s32.totalorder %v90, 0
    %vm111 = vcmp.lt.s32.totalorder %v97, 0
    %vm112 = vcmp.lt.s32.totalorder %v104, 0
    %vm113 = vmand %vm109, %vm105
    %vm114 = vmand %vm110, %vm106
    %vm115 = vmand %vm111, %vm107
    %vm116 = vmand %vm112, %vm108
    %v117 = vadd.s32 %v83, 16
    %v118 = vadd.s32 %v90, 16
    %v119 = vadd.s32 %v97, 16
    %v120 = vadd.s32 %v104, 16
    %v121 = vsel %vm113, %v117, %v83
    %v122 = vsel %vm114, %v118, %v90
    %v123 = vsel %vm115, %v119, %v97
    %v124 = vsel %vm116, %v120, %v104
    %vm125 = vcmp.ne.s32.totalorder %v121, 0
    %vm126 = vcmp.ne.s32.totalorder %v122, 0
    %vm127 = vcmp.ne.s32.totalorder %v123, 0
    %vm128 = vcmp.ne.s32.totalorder %v124, 0
    %vm129 = vcmp.ne.s32.totalorder %v121, 15
    %vm130 = vcmp.ne.s32.totalorder %v122, 15
    %vm131 = vcmp.ne.s32.totalorder %v123, 15
    %vm132 = vcmp.ne.s32.totalorder %v124, 15
    %v133 = vld [vmem:[#allocation5] sm:$0xff]
    %v134 = vld [vmem:[#allocation5 + $0x8] sm:$0xff]
    %v135 = vld [vmem:[#allocation5 + $0x10] sm:$0xff]
    %v136 = vld [vmem:[#allocation5 + $0x18] sm:$0xff]
    %v137 = vld [vmem:[#allocation5 + $0x20] sm:$0xff]
    %v138 = vld [vmem:[#allocation5 + $0x28] sm:$0xff]
    %v139 = vld [vmem:[#allocation5 + $0x30] sm:$0xff]
    %v140 = vld [vmem:[#allocation5 + $0x38] sm:$0xff]
    %vm141 = vcmask 523264
    %v143 = vsel %vm141, %v68, 0
    %v146 = vsel %vm141, %v69, 0
    %v149 = vsel %vm141, %v70, 0
    %v152 = vsel %vm141, %v71, 0
    %154 = vmatpush.msra.mxu0 0.0
    %155 = vmatpush.msra.mxu0 0.0
    %156 = vmatpush.msra.mxu0 0.0
    %157 = vmatpush.msra.mxu0 0.0
    %158 = vmatpush.msra.mxu0 0.0
    %159 = vmatpush.msra.mxu0 0.0
    %160 = vmatpush.msra.mxu0 0.0
    %161 = vmatpush.msra.mxu0 0.0
    %162 = vmatpush.msra.mxu0 %v140
    %163 = vmatpush.msra.mxu0 %v139
    %164 = vmatpush.msra.mxu0 %v138
    %165 = vmatpush.msra.mxu0 %v137
    %166 = vmatpush.msra.mxu0 %v136
    %167 = vmatpush.msra.mxu0 %v135
    %168 = vmatpush.msra.mxu0 %v134
    %169 = vmatpush.msra.mxu0 %v133
    %170 = vmatmul.f32.gmra.mxu0 %v143
    %v171 = vpop.f32.mrf.mxu0
    %v172 = vadd.f32 0.0, %v171
    %173 = vmatmul.f32.gmra.mxu0 %v146
    %v174 = vpop.f32.mrf.mxu0
    %v175 = vadd.f32 0.0, %v174
    %176 = vmatmul.f32.gmra.mxu0 %v149
    %v177 = vpop.f32.mrf.mxu0
    %v178 = vadd.f32 0.0, %v177
    %179 = vmatmul.f32.gmra.mxu0 %v152
    %v180 = vpop.f32.mrf.mxu0
    %v181 = vadd.f32 0.0, %v180
    %182 = vdwg.mxu0
    %s183 = scalar_lea.vmem [#allocation5], 64
    %v184 = vld [vmem:[%s183] sm:$0xff]
    %v185 = vld [vmem:[%s183 + $0x8] sm:$0xff]
    %v186 = vld [vmem:[%s183 + $0x10] sm:$0xff]
    %v187 = vld [vmem:[%s183 + $0x18] sm:$0xff]
    %v188 = vld [vmem:[%s183 + $0x20] sm:$0xff]
    %v189 = vld [vmem:[%s183 + $0x28] sm:$0xff]
    %v190 = vld [vmem:[%s183 + $0x30] sm:$0xff]
    %v191 = vld [vmem:[%s183 + $0x38] sm:$0xff]
    %s192 = scalar_lea.vmem [#allocation5], 128
    %v193 = vld [vmem:[%s192] sm:$0xff]
    %v194 = vld [vmem:[%s192 + $0x8] sm:$0xff]
    %v195 = vld [vmem:[%s192 + $0x10] sm:$0xff]
    %v196 = vld [vmem:[%s192 + $0x18] sm:$0xff]
    %v197 = vld [vmem:[%s192 + $0x20] sm:$0xff]
    %v198 = vld [vmem:[%s192 + $0x28] sm:$0xff]
    %v199 = vld [vmem:[%s192 + $0x30] sm:$0xff]
    %v200 = vld [vmem:[%s192 + $0x38] sm:$0xff]
    %201 = vmatpush.msra.mxu0 0.0
    %202 = vmatpush.msra.mxu0 0.0
    %203 = vmatpush.msra.mxu0 0.0
    %204 = vmatpush.msra.mxu0 0.0
    %205 = vmatpush.msra.mxu0 0.0
    %206 = vmatpush.msra.mxu0 0.0
    %207 = vmatpush.msra.mxu0 0.0
    %208 = vmatpush.msra.mxu0 0.0
    %209 = vmatpush.msra.mxu0 %v200
    %210 = vmatpush.msra.mxu0 %v199
    %211 = vmatpush.msra.mxu0 %v198
    %212 = vmatpush.msra.mxu0 %v197
    %213 = vmatpush.msra.mxu0 %v196
    %214 = vmatpush.msra.mxu0 %v195
    %215 = vmatpush.msra.mxu0 %v194
    %216 = vmatpush.msra.mxu0 %v193
    %217 = vmatmul.f32.gmra.mxu0 %v143
    %v218 = vpop.f32.mrf.mxu0
    %v219 = vadd.f32 0.0, %v218
    %220 = vmatmul.f32.gmra.mxu0 %v146
    %v221 = vpop.f32.mrf.mxu0
    %v222 = vadd.f32 0.0, %v221
    %223 = vmatmul.f32.gmra.mxu0 %v149
    %v224 = vpop.f32.mrf.mxu0
    %v225 = vadd.f32 0.0, %v224
    %226 = vmatmul.f32.gmra.mxu0 %v152
    %v227 = vpop.f32.mrf.mxu0
    %v228 = vadd.f32 0.0, %v227
    %229 = vdwg.mxu0
    %v230 = vrot.slane %v172, 7
    %v231 = vrot.slane %v175, 7
    %v232 = vrot.slane %v178, 7
    %v233 = vrot.slane %v181, 7
    %vm234 = vcmp.lt.s32.totalorder %v73, 1
    %v235 = vsel %vm234, %v232, %v233
    %v236 = vsel %vm234, %v231, %v232
    %v237 = vsel %vm234, %v230, %v231
    %v238 = vsel %vm234, %v233, %v230
    %v239 = vsel %vm125, 1, 0
    %v240 = vsel %vm126, 1, 0
    %v241 = vsel %vm127, 1, 0
    %v242 = vsel %vm128, 1, 0
    %vm243 = vcmp.eq.s32.totalorder %v239, 1
    %vm244 = vcmp.eq.s32.totalorder %v240, 1
    %vm245 = vcmp.eq.s32.totalorder %v241, 1
    %vm246 = vcmp.eq.s32.totalorder %v242, 1
    %v247 = vsel %vm243, %v238, 0.0
    %v248 = vsel %vm244, %v237, 0.0
    %v249 = vsel %vm245, %v236, 0.0
    %v250 = vsel %vm246, %v235, 0.0
    %v251 = vrot.slane %v219, 1
    %v252 = vrot.slane %v222, 1
    %v253 = vrot.slane %v225, 1
    %v254 = vrot.slane %v228, 1
    %vm255 = vcmp.lt.s32.totalorder %v73, 7
    %v256 = vsel %vm255, %v253, %v254
    %v257 = vsel %vm255, %v252, %v253
    %v258 = vsel %vm255, %v251, %v252
    %v259 = vsel %vm255, %v254, %v251
    %v260 = vsel %vm129, 1, 0
    %v261 = vsel %vm130, 1, 0
    %v262 = vsel %vm131, 1, 0
    %v263 = vsel %vm132, 1, 0
    %vm264 = vcmp.eq.s32.totalorder %v260, 1
    %vm265 = vcmp.eq.s32.totalorder %v261, 1
    %vm266 = vcmp.eq.s32.totalorder %v262, 1
    %vm267 = vcmp.eq.s32.totalorder %v263, 1
    %v268 = vsel %vm264, %v258, 0.0
    %v269 = vsel %vm265, %v257, 0.0
    %v270 = vsel %vm266, %v256, 0.0
    %v271 = vsel %vm267, %v259, 0.0
    %272 = vmatpush.msra.mxu0 0.0
    %273 = vmatpush.msra.mxu0 0.0
    %274 = vmatpush.msra.mxu0 0.0
    %275 = vmatpush.msra.mxu0 0.0
    %276 = vmatpush.msra.mxu0 0.0
    %277 = vmatpush.msra.mxu0 0.0
    %278 = vmatpush.msra.mxu0 0.0
    %279 = vmatpush.msra.mxu0 0.0
    %280 = vmatpush.msra.mxu0 %v191
    %281 = vmatpush.msra.mxu0 %v190
    %282 = vmatpush.msra.mxu0 %v189
    %283 = vmatpush.msra.mxu0 %v188
    %284 = vmatpush.msra.mxu0 %v187
    %285 = vmatpush.msra.mxu0 %v186
    %286 = vmatpush.msra.mxu0 %v185
    %287 = vmatpush.msra.mxu0 %v184
    %288 = vmatmul.f32.gmra.mxu0 %v143
    %v289 = vpop.f32.mrf.mxu0
    %v290 = vadd.f32 %v247, %v289
    %291 = vmatmul.f32.gmra.mxu0 %v146
    %v292 = vpop.f32.mrf.mxu0
    %v293 = vadd.f32 %v248, %v292
    %294 = vmatmul.f32.gmra.mxu0 %v149
    %v295 = vpop.f32.mrf.mxu0
    %v296 = vadd.f32 %v249, %v295
    %297 = vmatmul.f32.gmra.mxu0 %v152
    %v298 = vpop.f32.mrf.mxu0
    %v299 = vadd.f32 %v250, %v298
    %300 = vdwg.mxu0
    %v301 = vadd.f32 %v290, %v268
    %v302 = vadd.f32 %v293, %v269
    %v303 = vadd.f32 %v296, %v270
    %v304 = vadd.f32 %v299, %v271
    %v305 = vld [vmem:[%s2] sm:$0x1]
    %v307 = vperm.slane %v305, 0
    %v309 = vadd.f32 %v301, %v307
    %v310 = vadd.f32 %v302, %v307
    %v311 = vadd.f32 %v303, %v307
    %v312 = vadd.f32 %v304, %v307
    %v313 = vmax.f32 %v309, 0.0
    %v314 = vmax.f32 %v310, 0.0
    %v315 = vmax.f32 %v311, 0.0
    %v316 = vmax.f32 %v312, 0.0
    %v317 = vld [vmem:[#allocation7] sm:$0xff]
    %v318 = vld [vmem:[#allocation7 + $0x8] sm:$0xff]
    %v319 = vld [vmem:[#allocation7 + $0x10] sm:$0xff]
    %v320 = vld [vmem:[#allocation7 + $0x18] sm:$0xff]
    %v321 = vld [vmem:[#allocation7 + $0x20] sm:$0xff]
    %v322 = vld [vmem:[#allocation7 + $0x28] sm:$0xff]
    %v323 = vld [vmem:[#allocation7 + $0x30] sm:$0xff]
    %v324 = vld [vmem:[#allocation7 + $0x38] sm:$0xff]
    %v325 = vld [vmem:[#allocation7 + $0x40] sm:$0xff]
    %v326 = vld [vmem:[#allocation7 + $0x48] sm:$0xff]
    %v327 = vld [vmem:[#allocation7 + $0x50] sm:$0xff]
    %v328 = vld [vmem:[#allocation7 + $0x58] sm:$0xff]
    %v329 = vld [vmem:[#allocation7 + $0x60] sm:$0xff]
    %v330 = vld [vmem:[#allocation7 + $0x68] sm:$0xff]
    %v331 = vld [vmem:[#allocation7 + $0x70] sm:$0xff]
    %v332 = vld [vmem:[#allocation7 + $0x78] sm:$0xff]
    %333 = vmatpush.msra.mxu0 %v332
    %334 = vmatpush.msra.mxu0 %v331
    %335 = vmatpush.msra.mxu0 %v330
    %336 = vmatpush.msra.mxu0 %v329
    %337 = vmatpush.msra.mxu0 %v328
    %338 = vmatpush.msra.mxu0 %v327
    %339 = vmatpush.msra.mxu0 %v326
    %340 = vmatpush.msra.mxu0 %v325
    %341 = vmatpush.msra.mxu0 %v324
    %342 = vmatpush.msra.mxu0 %v323
    %343 = vmatpush.msra.mxu0 %v322
    %344 = vmatpush.msra.mxu0 %v321
    %345 = vmatpush.msra.mxu0 %v320
    %346 = vmatpush.msra.mxu0 %v319
    %347 = vmatpush.msra.mxu0 %v318
    %348 = vmatpush.msra.mxu0 %v317
    %349 = vmatmul.f32.gmra.mxu0 %v313
    %v350 = vpop.f32.mrf.mxu0
    %v351 = vadd.f32 0.0, %v350
    %352 = vmatmul.f32.gmra.mxu0 %v314
    %v353 = vpop.f32.mrf.mxu0
    %v354 = vadd.f32 0.0, %v353
    %355 = vmatmul.f32.gmra.mxu0 %v315
    %v356 = vpop.f32.mrf.mxu0
    %v357 = vadd.f32 0.0, %v356
    %358 = vmatmul.f32.gmra.mxu0 %v316
    %v359 = vpop.f32.mrf.mxu0
    %v360 = vadd.f32 0.0, %v359
    %361 = vdwg.mxu0
    %s362 = scalar_lea.vmem [#allocation7], 128
    %v363 = vld [vmem:[%s362] sm:$0xff]
    %v364 = vld [vmem:[%s362 + $0x8] sm:$0xff]
    %v365 = vld [vmem:[%s362 + $0x10] sm:$0xff]
    %v366 = vld [vmem:[%s362 + $0x18] sm:$0xff]
    %v367 = vld [vmem:[%s362 + $0x20] sm:$0xff]
    %v368 = vld [vmem:[%s362 + $0x28] sm:$0xff]
    %v369 = vld [vmem:[%s362 + $0x30] sm:$0xff]
    %v370 = vld [vmem:[%s362 + $0x38] sm:$0xff]
    %v371 = vld [vmem:[%s362 + $0x40] sm:$0xff]
    %v372 = vld [vmem:[%s362 + $0x48] sm:$0xff]
    %v373 = vld [vmem:[%s362 + $0x50] sm:$0xff]
    %v374 = vld [vmem:[%s362 + $0x58] sm:$0xff]
    %v375 = vld [vmem:[%s362 + $0x60] sm:$0xff]
    %v376 = vld [vmem:[%s362 + $0x68] sm:$0xff]
    %v377 = vld [vmem:[%s362 + $0x70] sm:$0xff]
    %v378 = vld [vmem:[%s362 + $0x78] sm:$0xff]
    %s379 = scalar_lea.vmem [#allocation7], 256
    %v380 = vld [vmem:[%s379] sm:$0xff]
    %v381 = vld [vmem:[%s379 + $0x8] sm:$0xff]
    %v382 = vld [vmem:[%s379 + $0x10] sm:$0xff]
    %v383 = vld [vmem:[%s379 + $0x18] sm:$0xff]
    %v384 = vld [vmem:[%s379 + $0x20] sm:$0xff]
    %v385 = vld [vmem:[%s379 + $0x28] sm:$0xff]
    %v386 = vld [vmem:[%s379 + $0x30] sm:$0xff]
    %v387 = vld [vmem:[%s379 + $0x38] sm:$0xff]
    %v388 = vld [vmem:[%s379 + $0x40] sm:$0xff]
    %v389 = vld [vmem:[%s379 + $0x48] sm:$0xff]
    %v390 = vld [vmem:[%s379 + $0x50] sm:$0xff]
    %v391 = vld [vmem:[%s379 + $0x58] sm:$0xff]
    %v392 = vld [vmem:[%s379 + $0x60] sm:$0xff]
    %v393 = vld [vmem:[%s379 + $0x68] sm:$0xff]
    %v394 = vld [vmem:[%s379 + $0x70] sm:$0xff]
    %v395 = vld [vmem:[%s379 + $0x78] sm:$0xff]
    %396 = vmatpush.msra.mxu0 %v395
    %397 = vmatpush.msra.mxu0 %v394
    %398 = vmatpush.msra.mxu0 %v393
    %399 = vmatpush.msra.mxu0 %v392
    %400 = vmatpush.msra.mxu0 %v391
    %401 = vmatpush.msra.mxu0 %v390
    %402 = vmatpush.msra.mxu0 %v389
    %403 = vmatpush.msra.mxu0 %v388
    %404 = vmatpush.msra.mxu0 %v387
    %405 = vmatpush.msra.mxu0 %v386
    %406 = vmatpush.msra.mxu0 %v385
    %407 = vmatpush.msra.mxu0 %v384
    %408 = vmatpush.msra.mxu0 %v383
    %409 = vmatpush.msra.mxu0 %v382
    %410 = vmatpush.msra.mxu0 %v381
    %411 = vmatpush.msra.mxu0 %v380
    %412 = vmatmul.f32.gmra.mxu0 %v313
    %v413 = vpop.f32.mrf.mxu0
    %v414 = vadd.f32 0.0, %v413
    %415 = vmatmul.f32.gmra.mxu0 %v314
    %v416 = vpop.f32.mrf.mxu0
    %v417 = vadd.f32 0.0, %v416
    %418 = vmatmul.f32.gmra.mxu0 %v315
    %v419 = vpop.f32.mrf.mxu0
    %v420 = vadd.f32 0.0, %v419
    %421 = vmatmul.f32.gmra.mxu0 %v316
    %v422 = vpop.f32.mrf.mxu0
    %v423 = vadd.f32 0.0, %v422
    %424 = vdwg.mxu0
    %v425 = vrot.slane %v351, 7
    %v426 = vrot.slane %v354, 7
    %v427 = vrot.slane %v357, 7
    %v428 = vrot.slane %v360, 7
    %v429 = vsel %vm234, %v427, %v428
    %v430 = vsel %vm234, %v426, %v427
    %v431 = vsel %vm234, %v425, %v426
    %v432 = vsel %vm234, %v428, %v425
    %v433 = vsel %vm243, %v432, 0.0
    %v434 = vsel %vm244, %v431, 0.0
    %v435 = vsel %vm245, %v430, 0.0
    %v436 = vsel %vm246, %v429, 0.0
    %v437 = vrot.slane %v414, 1
    %v438 = vrot.slane %v417, 1
    %v439 = vrot.slane %v420, 1
    %v440 = vrot.slane %v423, 1
    %v441 = vsel %vm255, %v439, %v440
    %v442 = vsel %vm255, %v438, %v439
    %v443 = vsel %vm255, %v437, %v438
    %v444 = vsel %vm255, %v440, %v437
    %v445 = vsel %vm264, %v443, 0.0
    %v446 = vsel %vm265, %v442, 0.0
    %v447 = vsel %vm266, %v441, 0.0
    %v448 = vsel %vm267, %v444, 0.0
    %449 = vmatpush.msra.mxu0 %v378
    %450 = vmatpush.msra.mxu0 %v377
    %451 = vmatpush.msra.mxu0 %v376
    %452 = vmatpush.msra.mxu0 %v375
    %453 = vmatpush.msra.mxu0 %v374
    %454 = vmatpush.msra.mxu0 %v373
    %455 = vmatpush.msra.mxu0 %v372
    %456 = vmatpush.msra.mxu0 %v371
    %457 = vmatpush.msra.mxu0 %v370
    %458 = vmatpush.msra.mxu0 %v369
    %459 = vmatpush.msra.mxu0 %v368
    %460 = vmatpush.msra.mxu0 %v367
    %461 = vmatpush.msra.mxu0 %v366
    %462 = vmatpush.msra.mxu0 %v365
    %463 = vmatpush.msra.mxu0 %v364
    %464 = vmatpush.msra.mxu0 %v363
    %465 = vmatmul.f32.gmra.mxu0 %v313
    %v466 = vpop.f32.mrf.mxu0
    %v467 = vadd.f32 %v433, %v466
    %468 = vmatmul.f32.gmra.mxu0 %v314
    %v469 = vpop.f32.mrf.mxu0
    %v470 = vadd.f32 %v434, %v469
    %471 = vmatmul.f32.gmra.mxu0 %v315
    %v472 = vpop.f32.mrf.mxu0
    %v473 = vadd.f32 %v435, %v472
    %474 = vmatmul.f32.gmra.mxu0 %v316
    %v475 = vpop.f32.mrf.mxu0
    %v476 = vadd.f32 %v436, %v475
    %477 = vdwg.mxu0
    %v478 = vadd.f32 %v467, %v445
    %v479 = vadd.f32 %v470, %v446
    %v480 = vadd.f32 %v473, %v447
    %v481 = vadd.f32 %v476, %v448
    %v482 = vld [vmem:[%s4] sm:$0x1]
    %v484 = vperm.slane %v482, 0
    %v486 = vadd.f32 %v478, %v484
    %v487 = vadd.f32 %v479, %v484
    %v488 = vadd.f32 %v480, %v484
    %v489 = vadd.f32 %v481, %v484
    %v490 = vmax.f32 %v486, 0.0
    %v491 = vmax.f32 %v487, 0.0
    %v492 = vmax.f32 %v488, 0.0
    %v493 = vmax.f32 %v489, 0.0
    %494 = vst [vmem:[#allocation8] sm:$0xff] %v490
    %495 = vst [vmem:[#allocation8 + $0x8] sm:$0xff] %v491
    %496 = vst [vmem:[#allocation8 + $0x10] sm:$0xff] %v492
    %497 = vst [vmem:[#allocation8 + $0x18] sm:$0xff] %v493
    // Predicated region
    $region34: #{tpu_custom_call.1} parent=1 // pred_check
      _
    $region35: #{tpu_custom_call.1} parent=1 // pred_check_branch
      %499 = sbr.rel (0) target = $region37
    $region36: #{tpu_custom_call.1} parent=1 // pred_region
      %501 = vsyncadd [#allocation4], 0
      %s502 = sshll.u32 [#allocation8], 4
      %s503 = int_to_ptr.vmem [resolvable:$true] %s502
      %s504 = sshll.u32 %s5, 4
      %s505 = int_to_ptr.hbm [resolvable:$true] %s504
      %510 = dma.vmem_to_hbm [thread:$0]  %s503, 512, %s505, [#allocation4], 128, 128, 8
    $region37: #{tpu_custom_call.1} parent=1 // pred_fallthru
      _
    // Predicated region
    $region38: #{tpu_custom_call.1} parent=1 // pred_check
      _
    $region39: #{tpu_custom_call.1} parent=1 // pred_check_branch
      %512 = sbr.rel (0) target = $region41
    $region40: #{tpu_custom_call.1} parent=1 // pred_region
      %514 = dma.done [#allocation4], 512
    $region41: #{tpu_custom_call.1} parent=1 // pred_fallthru
      _
    %515 = vsyncpa [#allocation3], 1
    %516 = vsyncpa [#allocation6], 1
    %517 = vsyncpa [#allocation4], 1

</llo_original>
